<compile_context>
chip_gen: v5e
topology: v5e:2x2
jax: 0.10.0
libtpu: 0.0.40
codegen_flags: <defaults>
</compile_context>

<pallas_src>
import functools

import jax
import jax.numpy as jnp
from jax import lax
from jax.experimental import pallas as pl
from jax.experimental.pallas import tpu as pltpu


def _round_up(x, m):
    return ((x + m - 1) // m) * m


# ----------------------------------------------------------------------------
# Weight-slab layout (host-side packing <-> in-kernel static slices)
# ----------------------------------------------------------------------------
def _slab_layout(embed_dim, hidden_dim, output_dim):
    """Row offsets of each parameter block inside the packed (rows, 128) slab."""
    h2 = 2 * hidden_dim
    lanes = _round_up(max(h2, embed_dim, output_dim, 1), 128)
    layout, rows = {}, 0

    def add(name, nrows):
        nonlocal rows
        layout[name] = rows
        rows += _round_up(nrows, 8)          # keep every block sublane-aligned

    for l in range(3):
        add(f"whh{l}", h2)                   # block-diagonal recurrent weight
        add(f"wih{l}", embed_dim if l == 0 else h2)
    add("fcw", h2)
    add("bias", 8)                           # rows bias+0..2: layer biases, +3: fc bias
    return layout, rows, lanes


def _pack_params(params, embed_dim, hidden_dim, output_dim):
    """Pre-concatenate all weights/biases into one lane-dense VMEM slab."""
    H, H2, O = hidden_dim, 2 * hidden_dim, output_dim
    layout, rows, lanes = _slab_layout(embed_dim, hidden_dim, output_dim)
    slab = jnp.zeros((rows, lanes), jnp.float32)

    def put(name, block):
        r = layout[name]
        nr, nc = block.shape
        return slab.at[r:r + nr, 0:nc].set(block)

    for l, (fwd, bwd) in enumerate(params["rnn"]):
        # block-diagonal recurrent weight: [Whh_f 0; 0 Whh_b]  (both transposed)
        whh = jnp.zeros((H2, H2), jnp.float32)
        whh = whh.at[0:H, 0:H].set(fwd["whh_t"]).at[H:H2, H:H2].set(bwd["whh_t"])
        slab = put(f"whh{l}", whh)
        # packed input projection: columns [fwd | bwd]
        slab = put(f"wih{l}", jnp.concatenate([fwd["wih_t"], bwd["wih_t"]], axis=1))
        # packed bias row: [b_f | b_b]
        brow = jnp.concatenate([fwd["bias"], bwd["bias"]], axis=1)           # (1, 2H)
        slab = slab.at[layout["bias"] + l:layout["bias"] + l + 1, 0:H2].set(brow)

    slab = put("fcw", params["fc_w_t"])                                      # (2H, O)
    slab = slab.at[layout["bias"] + 3:layout["bias"] + 4, 0:O].set(params["fc_b"])

    vocab = params["embedding"].shape[0]
    vocab_pad = _round_up(vocab, 8)
    emb_pad = jnp.zeros((vocab_pad, embed_dim), jnp.float32)
    emb_pad = emb_pad.at[0:vocab, :].set(params["embedding"])
    return slab, emb_pad, vocab_pad


# ----------------------------------------------------------------------------
# Fused Pallas kernel: embedding gather + 3 bidirectional RNN layers + Linear
# ----------------------------------------------------------------------------
def _make_kernel(S, B, BP, E, H, O, VP, layout):
    H2 = 2 * H
    f32 = jnp.float32
    N = S * BP                               # padded (seq * batch) rows

    def kernel(ids_ref, emb_ref, slab_ref, out_ref):
        # ---- fused embedding gather (tiny vocab -> one-hot matmul) ----
        ids = ids_ref[...]                                            # (N, 1) int32
        vocab_iota = lax.broadcasted_iota(jnp.int32, (N, VP), 1)
        onehot = (vocab_iota == ids).astype(f32)                      # (N, VP)
        x = jnp.dot(onehot, emb_ref[...], preferred_element_type=f32)  # (N, E)

        # lane mask selecting the forward half of a packed (BP, 2H) tile;
        # hoisted once (broadcasts are not CSE'd by JAX).
        lane = lax.broadcasted_iota(jnp.int32, (BP, H2), 1)
        fwd_mask = lane < H

        def slab(name, nrows, ncols):
            r = layout[name]
            return slab_ref[r:r + nrows, 0:ncols]

        h_last = None
        for l in range(3):
            din = E if l == 0 else H2
            wih = slab(f"wih{l}", din, H2)                            # (din, 2H)
            bias = slab_ref[layout["bias"] + l:layout["bias"] + l + 1, 0:H2]
            # hoisted input projection for BOTH directions in one matmul
            xw = jnp.dot(x, wih, preferred_element_type=f32) + bias    # (N, 2H)
            whh = slab(f"whh{l}", H2, H2)                             # block-diag (2H, 2H)

            hs = []
            h = None
            for t in range(S):                # static & short -> fully unrolled
                tb = S - 1 - t                # backward-direction time index
                xw_t = xw[t * BP:(t + 1) * BP, :]                     # tile-aligned
                xw_tb = xw[tb * BP:(tb + 1) * BP, :]
                x_step = jnp.where(fwd_mask, xw_t, xw_tb)             # [fwd(t) | bwd(tb)]
                if t == 0:                    # h0 == 0 -> skip h @ W_hh
                    h = jnp.tanh(x_step)
                else:
                    h = jnp.tanh(x_step +
                                 jnp.dot(h, whh, preferred_element_type=f32))
                hs.append(h)
            # last step holds both final states: [h_f(S-1) | h_b(0)]
            h_last = hs[-1]

            if l < 2:
                # re-align the backward half to forward time order for the
                # next layer's input: y(s) = [h_f(s) | h_b(s)]
                x = jnp.concatenate(
                    [jnp.where(fwd_mask, hs[s], hs[S - 1 - s]) for s in range(S)],
                    axis=0)                                           # (N, 2H)

        # ---- fused FC epilogue on the register-resident final hidden state ----
        fcw = slab("fcw", H2, O)                                      # (2H, O)
        fcb = slab_ref[layout["bias"] + 3:layout["bias"] + 4, 0:O]    # (1, O)
        out = jnp.dot(h_last, fcw, preferred_element_type=f32) + fcb  # (BP, O)
        out_ref[...] = out[0:B, :].astype(out_ref.dtype)

    return kernel


# ----------------------------------------------------------------------------
# pallas_call wrapper (single launch, 3 input DMAs, 1 output DMA)
# ----------------------------------------------------------------------------
@functools.partial(jax.jit, static_argnames=(
    "seq", "batch", "batch_pad", "embed_dim", "hidden_dim", "output_dim",
    "vocab_pad"))
def _textrnn_fused(ids_flat, emb_pad, slab, *, seq, batch, batch_pad,
                   embed_dim, hidden_dim, output_dim, vocab_pad):
    layout, _, _ = _slab_layout(embed_dim, hidden_dim, output_dim)
    kernel = _make_kernel(seq, batch, batch_pad, embed_dim, hidden_dim,
                          output_dim, vocab_pad, layout)
    vmem_spec = pl.BlockSpec(memory_space=pltpu.MemorySpace.VMEM)
    return pl.pallas_call(
        kernel,
        out_shape=jax.ShapeDtypeStruct((batch, output_dim), jnp.float32),
        in_specs=[vmem_spec, vmem_spec, vmem_spec],
        out_specs=vmem_spec,
    )(ids_flat, emb_pad, slab)


# ----------------------------------------------------------------------------
# Parameter construction (mimics nn.RNN / nn.Linear shapes, deterministic)
# ----------------------------------------------------------------------------
def init_params(key, vocab_size, embed_dim, hidden_dim, output_dim,
                num_layers=3, bidirectional=True):
    params = {}
    key, k_emb = jax.random.split(key)
    params["embedding"] = jax.random.normal(
        k_emb, (vocab_size, embed_dim), jnp.float32)

    directions = 2 if bidirectional else 1
    k = 1.0 / jnp.sqrt(hidden_dim)
    rnn = []
    for layer in range(num_layers):
        din = embed_dim if layer == 0 else hidden_dim * directions
        dirs = []
        for _ in range(directions):
            key, k1, k2, k3, k4 = jax.random.split(key, 5)
            w_ih = jax.random.uniform(k1, (hidden_dim, din), jnp.float32, -k, k)
            w_hh = jax.random.uniform(k2, (hidden_dim, hidden_dim),
                                      jnp.float32, -k, k)
            b_ih = jax.random.uniform(k3, (hidden_dim,), jnp.float32, -k, k)
            b_hh = jax.random.uniform(k4, (hidden_dim,), jnp.float32, -k, k)
            dirs.append({
                "wih_t": w_ih.T,                               # (din, H)
                "whh_t": w_hh.T,                               # (H, H)
                "bias": (b_ih + b_hh).reshape(1, hidden_dim),  # (1, H)
            })
        rnn.append(dirs)
    params["rnn"] = rnn

    fc_in = hidden_dim * directions
    kf = 1.0 / jnp.sqrt(fc_in)
    key, k5, k6 = jax.random.split(key, 3)
    w_fc = jax.random.uniform(k5, (output_dim, fc_in), jnp.float32, -kf, kf)
    b_fc = jax.random.uniform(k6, (output_dim,), jnp.float32, -kf, kf)
    params["fc_w_t"] = w_fc.T                      # (fc_in, O)
    params["fc_b"] = b_fc.reshape(1, output_dim)   # (1, O)

    # Host-side pre-packing of everything the kernel needs (done ONCE here).
    slab, emb_pad, vocab_pad = _pack_params(params, embed_dim, hidden_dim,
                                            output_dim)
    params["slab"] = slab
    params["emb_pad"] = emb_pad
    params["vocab_pad"] = vocab_pad
    return params


# ----------------------------------------------------------------------------
# Forward pass (only glue outside the kernel is padding/flattening the ids)
# ----------------------------------------------------------------------------
def text_rnn_forward(token_ids, params):
    B, S = token_ids.shape
    BP = _round_up(B, 8)                         # sublane-aligned batch rows
    E = params["embedding"].shape[1]
    H = params["rnn"][0][0]["whh_t"].shape[0]
    O = params["fc_w_t"].shape[1]

    # seq-major flattened ids (row t*BP + b), padded batch rows use token 0
    ids_pad = jnp.zeros((S, BP), jnp.int32).at[:, 0:B].set(token_ids.T)
    ids_flat = ids_pad.reshape(S * BP, 1)

    return _textrnn_fused(ids_flat, params["emb_pad"], params["slab"],
                          seq=S, batch=B, batch_pad=BP, embed_dim=E,
                          hidden_dim=H, output_dim=O,
                          vocab_pad=params["vocab_pad"])


# ----------------------------------------------------------------------------
# Pure-JAX reference (PyTorch nn.RNN bidirectional semantics) for checking
# ----------------------------------------------------------------------------
def _reference_forward(token_ids, params):
    emb = params["embedding"][token_ids]           # (B, S, E)
    x = jnp.transpose(emb, (1, 0, 2))              # (S, B, E)

    def run_dir(x_seq, wih_t, whh_t, b):
        h0 = jnp.zeros((x_seq.shape[1], whh_t.shape[0]), jnp.float32)

        def step(h, xt):
            h = jnp.tanh(xt @ wih_t + h @ whh_t + b)
            return h, h

        h_fin, ys = lax.scan(step, h0, x_seq)
        return ys, h_fin

    h_f = h_b = None
    for layer in params["rnn"]:
        y_f, h_f = run_dir(x, layer[0]["wih_t"], layer[0]["whh_t"],
                           layer[0]["bias"])
        y_b_rev, h_b = run_dir(x[::-1], layer[1]["wih_t"], layer[1]["whh_t"],
                               layer[1]["bias"])
        x = jnp.concatenate([y_f, y_b_rev[::-1]], axis=-1)

    hn = jnp.concatenate([h_f, h_b], axis=-1)
    return hn @ params["fc_w_t"] + params["fc_b"]


# ----------------------------------------------------------------------------
if __name__ == "__main__":
    VOCAB, EMBED, HIDDEN, OUT = 50, 16, 32, 8
    BATCH, SEQ = 2, 8

    key = jax.random.PRNGKey(0)
    key, k_ids = jax.random.split(key)
    token_ids = jax.random.randint(k_ids, (BATCH, SEQ), 0, VOCAB, jnp.int32)

    params = init_params(key, VOCAB, EMBED, HIDDEN, OUT,
                         num_layers=3, bidirectional=True)

    out = text_rnn_forward(token_ids, params)
    out = jax.block_until_ready(out)
    assert out.shape == (BATCH, OUT), out.shape
    assert out.dtype == jnp.float32

    ref = jax.block_until_ready(_reference_forward(token_ids, params))
    assert jnp.allclose(out, ref, atol=1e-3, rtol=1e-3), (out, ref)
    print("KERNEL_OK")
</pallas_src>

<mosaic_0001>
module attributes {stable_mosaic.version = 11 : i64} {
  func.func @kernel(%arg0: memref<64x1xi32, #tpu.memory_space<vmem>>, %arg1: memref<56x16xf32, #tpu.memory_space<vmem>>, %arg2: memref<408x128xf32, #tpu.memory_space<vmem>>, %arg3: memref<2x8xf32, #tpu.memory_space<vmem>>) attributes {dimension_semantics = [], scalar_prefetch = 0 : i64, scratch_operands = 0 : i64, tpu.core_type = #tpu.core_type<tc>} {
    %c0 = arith.constant 0 : index
    %c0_0 = arith.constant 0 : index
    %0 = vector.load %arg0[%c0, %c0_0] : memref<64x1xi32, #tpu.memory_space<vmem>>, vector<64x1xi32>
    %1 = tpu.iota {dimensions = array<i32: 1>} : vector<64x56xi32>
    %2 = vector.broadcast %0 : vector<64x1xi32> to vector<64x56xi32>
    %3 = arith.cmpi eq, %1, %2 : vector<64x56xi32>
    %4 = arith.extui %3 : vector<64x56xi1> to vector<64x56xi32>
    %5 = arith.sitofp %4 : vector<64x56xi32> to vector<64x56xf32>
    %c0_1 = arith.constant 0 : index
    %c0_2 = arith.constant 0 : index
    %6 = vector.load %arg1[%c0_1, %c0_2] : memref<56x16xf32, #tpu.memory_space<vmem>>, vector<56x16xf32>
    %cst = arith.constant dense<0.000000e+00> : vector<64x16xf32>
    %7 = tpu.matmul %5, %6, %cst {dimension_numbers = #tpu.dot_dimension_numbers<[1], [0], [0], [1], [0, 0, 1, 1], [], []>} : vector<64x56xf32>, vector<56x16xf32>, vector<64x16xf32> -> vector<64x16xf32>
    %8 = tpu.iota {dimensions = array<i32: 1>} : vector<8x64xi32>
    %c32_i32 = arith.constant 32 : i32
    %9 = vector.broadcast %c32_i32 : i32 to vector<8x64xi32>
    %10 = arith.cmpi slt, %8, %9 : vector<8x64xi32>
    %c64 = arith.constant 64 : index
    %c0_3 = arith.constant 0 : index
    %11 = vector.load %arg2[%c64, %c0_3] : memref<408x128xf32, #tpu.memory_space<vmem>>, vector<16x64xf32>
    %c400 = arith.constant 400 : index
    %c0_4 = arith.constant 0 : index
    %12 = vector.load %arg2[%c400, %c0_4] : memref<408x128xf32, #tpu.memory_space<vmem>>, vector<1x64xf32>
    %cst_5 = arith.constant dense<0.000000e+00> : vector<64x64xf32>
    %13 = tpu.matmul %7, %11, %cst_5 {dimension_numbers = #tpu.dot_dimension_numbers<[1], [0], [0], [1], [0, 0, 1, 1], [], []>} : vector<64x16xf32>, vector<16x64xf32>, vector<64x64xf32> -> vector<64x64xf32>
    %14 = vector.broadcast %12 : vector<1x64xf32> to vector<64x64xf32>
    %15 = arith.addf %13, %14 : vector<64x64xf32>
    %c0_6 = arith.constant 0 : index
    %c0_7 = arith.constant 0 : index
    %16 = vector.load %arg2[%c0_6, %c0_7] : memref<408x128xf32, #tpu.memory_space<vmem>>, vector<64x64xf32>
    %17 = vector.extract_strided_slice %15 {offsets = [0, 0], sizes = [8, 64], strides = [1, 1]} : vector<64x64xf32> to vector<8x64xf32>
    %18 = vector.extract_strided_slice %15 {offsets = [56, 0], sizes = [8, 64], strides = [1, 1]} : vector<64x64xf32> to vector<8x64xf32>
    %19 = arith.select %10, %17, %18 : vector<8x64xi1>, vector<8x64xf32>
    %20 = math.tanh %19 : vector<8x64xf32>
    %21 = vector.extract_strided_slice %15 {offsets = [8, 0], sizes = [8, 64], strides = [1, 1]} : vector<64x64xf32> to vector<8x64xf32>
    %22 = vector.extract_strided_slice %15 {offsets = [48, 0], sizes = [8, 64], strides = [1, 1]} : vector<64x64xf32> to vector<8x64xf32>
    %23 = arith.select %10, %21, %22 : vector<8x64xi1>, vector<8x64xf32>
    %cst_8 = arith.constant dense<0.000000e+00> : vector<8x64xf32>
    %24 = tpu.matmul %20, %16, %cst_8 {dimension_numbers = #tpu.dot_dimension_numbers<[1], [0], [0], [1], [0, 0, 1, 1], [], []>} : vector<8x64xf32>, vector<64x64xf32>, vector<8x64xf32> -> vector<8x64xf32>
    %25 = arith.addf %23, %24 : vector<8x64xf32>
    %26 = math.tanh %25 : vector<8x64xf32>
    %27 = vector.extract_strided_slice %15 {offsets = [16, 0], sizes = [8, 64], strides = [1, 1]} : vector<64x64xf32> to vector<8x64xf32>
    %28 = vector.extract_strided_slice %15 {offsets = [40, 0], sizes = [8, 64], strides = [1, 1]} : vector<64x64xf32> to vector<8x64xf32>
    %29 = arith.select %10, %27, %28 : vector<8x64xi1>, vector<8x64xf32>
    %cst_9 = arith.constant dense<0.000000e+00> : vector<8x64xf32>
    %30 = tpu.matmul %26, %16, %cst_9 {dimension_numbers = #tpu.dot_dimension_numbers<[1], [0], [0], [1], [0, 0, 1, 1], [], []>} : vector<8x64xf32>, vector<64x64xf32>, vector<8x64xf32> -> vector<8x64xf32>
    %31 = arith.addf %29, %30 : vector<8x64xf32>
    %32 = math.tanh %31 : vector<8x64xf32>
    %33 = vector.extract_strided_slice %15 {offsets = [24, 0], sizes = [8, 64], strides = [1, 1]} : vector<64x64xf32> to vector<8x64xf32>
    %34 = vector.extract_strided_slice %15 {offsets = [32, 0], sizes = [8, 64], strides = [1, 1]} : vector<64x64xf32> to vector<8x64xf32>
    %35 = arith.select %10, %33, %34 : vector<8x64xi1>, vector<8x64xf32>
    %cst_10 = arith.constant dense<0.000000e+00> : vector<8x64xf32>
    %36 = tpu.matmul %32, %16, %cst_10 {dimension_numbers = #tpu.dot_dimension_numbers<[1], [0], [0], [1], [0, 0, 1, 1], [], []>} : vector<8x64xf32>, vector<64x64xf32>, vector<8x64xf32> -> vector<8x64xf32>
    %37 = arith.addf %35, %36 : vector<8x64xf32>
    %38 = math.tanh %37 : vector<8x64xf32>
    %39 = vector.extract_strided_slice %15 {offsets = [32, 0], sizes = [8, 64], strides = [1, 1]} : vector<64x64xf32> to vector<8x64xf32>
    %40 = vector.extract_strided_slice %15 {offsets = [24, 0], sizes = [8, 64], strides = [1, 1]} : vector<64x64xf32> to vector<8x64xf32>
    %41 = arith.select %10, %39, %40 : vector<8x64xi1>, vector<8x64xf32>
    %cst_11 = arith.constant dense<0.000000e+00> : vector<8x64xf32>
    %42 = tpu.matmul %38, %16, %cst_11 {dimension_numbers = #tpu.dot_dimension_numbers<[1], [0], [0], [1], [0, 0, 1, 1], [], []>} : vector<8x64xf32>, vector<64x64xf32>, vector<8x64xf32> -> vector<8x64xf32>
    %43 = arith.addf %41, %42 : vector<8x64xf32>
    %44 = math.tanh %43 : vector<8x64xf32>
    %45 = vector.extract_strided_slice %15 {offsets = [40, 0], sizes = [8, 64], strides = [1, 1]} : vector<64x64xf32> to vector<8x64xf32>
    %46 = vector.extract_strided_slice %15 {offsets = [16, 0], sizes = [8, 64], strides = [1, 1]} : vector<64x64xf32> to vector<8x64xf32>
    %47 = arith.select %10, %45, %46 : vector<8x64xi1>, vector<8x64xf32>
    %cst_12 = arith.constant dense<0.000000e+00> : vector<8x64xf32>
    %48 = tpu.matmul %44, %16, %cst_12 {dimension_numbers = #tpu.dot_dimension_numbers<[1], [0], [0], [1], [0, 0, 1, 1], [], []>} : vector<8x64xf32>, vector<64x64xf32>, vector<8x64xf32> -> vector<8x64xf32>
    %49 = arith.addf %47, %48 : vector<8x64xf32>
    %50 = math.tanh %49 : vector<8x64xf32>
    %51 = vector.extract_strided_slice %15 {offsets = [48, 0], sizes = [8, 64], strides = [1, 1]} : vector<64x64xf32> to vector<8x64xf32>
    %52 = vector.extract_strided_slice %15 {offsets = [8, 0], sizes = [8, 64], strides = [1, 1]} : vector<64x64xf32> to vector<8x64xf32>
    %53 = arith.select %10, %51, %52 : vector<8x64xi1>, vector<8x64xf32>
    %cst_13 = arith.constant dense<0.000000e+00> : vector<8x64xf32>
    %54 = tpu.matmul %50, %16, %cst_13 {dimension_numbers = #tpu.dot_dimension_numbers<[1], [0], [0], [1], [0, 0, 1, 1], [], []>} : vector<8x64xf32>, vector<64x64xf32>, vector<8x64xf32> -> vector<8x64xf32>
    %55 = arith.addf %53, %54 : vector<8x64xf32>
    %56 = math.tanh %55 : vector<8x64xf32>
    %57 = vector.extract_strided_slice %15 {offsets = [56, 0], sizes = [8, 64], strides = [1, 1]} : vector<64x64xf32> to vector<8x64xf32>
    %58 = vector.extract_strided_slice %15 {offsets = [0, 0], sizes = [8, 64], strides = [1, 1]} : vector<64x64xf32> to vector<8x64xf32>
    %59 = arith.select %10, %57, %58 : vector<8x64xi1>, vector<8x64xf32>
    %cst_14 = arith.constant dense<0.000000e+00> : vector<8x64xf32>
    %60 = tpu.matmul %56, %16, %cst_14 {dimension_numbers = #tpu.dot_dimension_numbers<[1], [0], [0], [1], [0, 0, 1, 1], [], []>} : vector<8x64xf32>, vector<64x64xf32>, vector<8x64xf32> -> vector<8x64xf32>
    %61 = arith.addf %59, %60 : vector<8x64xf32>
    %62 = math.tanh %61 : vector<8x64xf32>
    %63 = arith.select %10, %20, %62 : vector<8x64xi1>, vector<8x64xf32>
    %64 = arith.select %10, %26, %56 : vector<8x64xi1>, vector<8x64xf32>
    %65 = arith.select %10, %32, %50 : vector<8x64xi1>, vector<8x64xf32>
    %66 = arith.select %10, %38, %44 : vector<8x64xi1>, vector<8x64xf32>
    %67 = arith.select %10, %44, %38 : vector<8x64xi1>, vector<8x64xf32>
    %68 = arith.select %10, %50, %32 : vector<8x64xi1>, vector<8x64xf32>
    %69 = arith.select %10, %56, %26 : vector<8x64xi1>, vector<8x64xf32>
    %70 = arith.select %10, %62, %20 : vector<8x64xi1>, vector<8x64xf32>
    %71 = tpu.concatenate %63, %64, %65, %66, %67, %68, %69, %70 in 0 : vector<8x64xf32>, vector<8x64xf32>, vector<8x64xf32>, vector<8x64xf32>, vector<8x64xf32>, vector<8x64xf32>, vector<8x64xf32>, vector<8x64xf32> -> vector<64x64xf32>
    %c144 = arith.constant 144 : index
    %c0_15 = arith.constant 0 : index
    %72 = vector.load %arg2[%c144, %c0_15] : memref<408x128xf32, #tpu.memory_space<vmem>>, vector<64x64xf32>
    %c401 = arith.constant 401 : index
    %c0_16 = arith.constant 0 : index
    %73 = vector.load %arg2[%c401, %c0_16] : memref<408x128xf32, #tpu.memory_space<vmem>>, vector<1x64xf32>
    %cst_17 = arith.constant dense<0.000000e+00> : vector<64x64xf32>
    %74 = tpu.matmul %71, %72, %cst_17 {dimension_numbers = #tpu.dot_dimension_numbers<[1], [0], [0], [1], [0, 0, 1, 1], [], []>} : vector<64x64xf32>, vector<64x64xf32>, vector<64x64xf32> -> vector<64x64xf32>
    %75 = vector.broadcast %73 : vector<1x64xf32> to vector<64x64xf32>
    %76 = arith.addf %74, %75 : vector<64x64xf32>
    %c80 = arith.constant 80 : index
    %c0_18 = arith.constant 0 : index
    %77 = vector.load %arg2[%c80, %c0_18] : memref<408x128xf32, #tpu.memory_space<vmem>>, vector<64x64xf32>
    %78 = vector.extract_strided_slice %76 {offsets = [0, 0], sizes = [8, 64], strides = [1, 1]} : vector<64x64xf32> to vector<8x64xf32>
    %79 = vector.extract_strided_slice %76 {offsets = [56, 0], sizes = [8, 64], strides = [1, 1]} : vector<64x64xf32> to vector<8x64xf32>
    %80 = arith.select %10, %78, %79 : vector<8x64xi1>, vector<8x64xf32>
    %81 = math.tanh %80 : vector<8x64xf32>
    %82 = vector.extract_strided_slice %76 {offsets = [8, 0], sizes = [8, 64], strides = [1, 1]} : vector<64x64xf32> to vector<8x64xf32>
    %83 = vector.extract_strided_slice %76 {offsets = [48, 0], sizes = [8, 64], strides = [1, 1]} : vector<64x64xf32> to vector<8x64xf32>
    %84 = arith.select %10, %82, %83 : vector<8x64xi1>, vector<8x64xf32>
    %cst_19 = arith.constant dense<0.000000e+00> : vector<8x64xf32>
    %85 = tpu.matmul %81, %77, %cst_19 {dimension_numbers = #tpu.dot_dimension_numbers<[1], [0], [0], [1], [0, 0, 1, 1], [], []>} : vector<8x64xf32>, vector<64x64xf32>, vector<8x64xf32> -> vector<8x64xf32>
    %86 = arith.addf %84, %85 : vector<8x64xf32>
    %87 = math.tanh %86 : vector<8x64xf32>
    %88 = vector.extract_strided_slice %76 {offsets = [16, 0], sizes = [8, 64], strides = [1, 1]} : vector<64x64xf32> to vector<8x64xf32>
    %89 = vector.extract_strided_slice %76 {offsets = [40, 0], sizes = [8, 64], strides = [1, 1]} : vector<64x64xf32> to vector<8x64xf32>
    %90 = arith.select %10, %88, %89 : vector<8x64xi1>, vector<8x64xf32>
    %cst_20 = arith.constant dense<0.000000e+00> : vector<8x64xf32>
    %91 = tpu.matmul %87, %77, %cst_20 {dimension_numbers = #tpu.dot_dimension_numbers<[1], [0], [0], [1], [0, 0, 1, 1], [], []>} : vector<8x64xf32>, vector<64x64xf32>, vector<8x64xf32> -> vector<8x64xf32>
    %92 = arith.addf %90, %91 : vector<8x64xf32>
    %93 = math.tanh %92 : vector<8x64xf32>
    %94 = vector.extract_strided_slice %76 {offsets = [24, 0], sizes = [8, 64], strides = [1, 1]} : vector<64x64xf32> to vector<8x64xf32>
    %95 = vector.extract_strided_slice %76 {offsets = [32, 0], sizes = [8, 64], strides = [1, 1]} : vector<64x64xf32> to vector<8x64xf32>
    %96 = arith.select %10, %94, %95 : vector<8x64xi1>, vector<8x64xf32>
    %cst_21 = arith.constant dense<0.000000e+00> : vector<8x64xf32>
    %97 = tpu.matmul %93, %77, %cst_21 {dimension_numbers = #tpu.dot_dimension_numbers<[1], [0], [0], [1], [0, 0, 1, 1], [], []>} : vector<8x64xf32>, vector<64x64xf32>, vector<8x64xf32> -> vector<8x64xf32>
    %98 = arith.addf %96, %97 : vector<8x64xf32>
    %99 = math.tanh %98 : vector<8x64xf32>
    %100 = vector.extract_strided_slice %76 {offsets = [32, 0], sizes = [8, 64], strides = [1, 1]} : vector<64x64xf32> to vector<8x64xf32>
    %101 = vector.extract_strided_slice %76 {offsets = [24, 0], sizes = [8, 64], strides = [1, 1]} : vector<64x64xf32> to vector<8x64xf32>
    %102 = arith.select %10, %100, %101 : vector<8x64xi1>, vector<8x64xf32>
    %cst_22 = arith.constant dense<0.000000e+00> : vector<8x64xf32>
    %103 = tpu.matmul %99, %77, %cst_22 {dimension_numbers = #tpu.dot_dimension_numbers<[1], [0], [0], [1], [0, 0, 1, 1], [], []>} : vector<8x64xf32>, vector<64x64xf32>, vector<8x64xf32> -> vector<8x64xf32>
    %104 = arith.addf %102, %103 : vector<8x64xf32>
    %105 = math.tanh %104 : vector<8x64xf32>
    %106 = vector.extract_strided_slice %76 {offsets = [40, 0], sizes = [8, 64], strides = [1, 1]} : vector<64x64xf32> to vector<8x64xf32>
    %107 = vector.extract_strided_slice %76 {offsets = [16, 0], sizes = [8, 64], strides = [1, 1]} : vector<64x64xf32> to vector<8x64xf32>
    %108 = arith.select %10, %106, %107 : vector<8x64xi1>, vector<8x64xf32>
    %cst_23 = arith.constant dense<0.000000e+00> : vector<8x64xf32>
    %109 = tpu.matmul %105, %77, %cst_23 {dimension_numbers = #tpu.dot_dimension_numbers<[1], [0], [0], [1], [0, 0, 1, 1], [], []>} : vector<8x64xf32>, vector<64x64xf32>, vector<8x64xf32> -> vector<8x64xf32>
    %110 = arith.addf %108, %109 : vector<8x64xf32>
    %111 = math.tanh %110 : vector<8x64xf32>
    %112 = vector.extract_strided_slice %76 {offsets = [48, 0], sizes = [8, 64], strides = [1, 1]} : vector<64x64xf32> to vector<8x64xf32>
    %113 = vector.extract_strided_slice %76 {offsets = [8, 0], sizes = [8, 64], strides = [1, 1]} : vector<64x64xf32> to vector<8x64xf32>
    %114 = arith.select %10, %112, %113 : vector<8x64xi1>, vector<8x64xf32>
    %cst_24 = arith.constant dense<0.000000e+00> : vector<8x64xf32>
    %115 = tpu.matmul %111, %77, %cst_24 {dimension_numbers = #tpu.dot_dimension_numbers<[1], [0], [0], [1], [0, 0, 1, 1], [], []>} : vector<8x64xf32>, vector<64x64xf32>, vector<8x64xf32> -> vector<8x64xf32>
    %116 = arith.addf %114, %115 : vector<8x64xf32>
    %117 = math.tanh %116 : vector<8x64xf32>
    %118 = vector.extract_strided_slice %76 {offsets = [56, 0], sizes = [8, 64], strides = [1, 1]} : vector<64x64xf32> to vector<8x64xf32>
    %119 = vector.extract_strided_slice %76 {offsets = [0, 0], sizes = [8, 64], strides = [1, 1]} : vector<64x64xf32> to vector<8x64xf32>
    %120 = arith.select %10, %118, %119 : vector<8x64xi1>, vector<8x64xf32>
    %cst_25 = arith.constant dense<0.000000e+00> : vector<8x64xf32>
    %121 = tpu.matmul %117, %77, %cst_25 {dimension_numbers = #tpu.dot_dimension_numbers<[1], [0], [0], [1], [0, 0, 1, 1], [], []>} : vector<8x64xf32>, vector<64x64xf32>, vector<8x64xf32> -> vector<8x64xf32>
    %122 = arith.addf %120, %121 : vector<8x64xf32>
    %123 = math.tanh %122 : vector<8x64xf32>
    %124 = arith.select %10, %81, %123 : vector<8x64xi1>, vector<8x64xf32>
    %125 = arith.select %10, %87, %117 : vector<8x64xi1>, vector<8x64xf32>
    %126 = arith.select %10, %93, %111 : vector<8x64xi1>, vector<8x64xf32>
    %127 = arith.select %10, %99, %105 : vector<8x64xi1>, vector<8x64xf32>
    %128 = arith.select %10, %105, %99 : vector<8x64xi1>, vector<8x64xf32>
    %129 = arith.select %10, %111, %93 : vector<8x64xi1>, vector<8x64xf32>
    %130 = arith.select %10, %117, %87 : vector<8x64xi1>, vector<8x64xf32>
    %131 = arith.select %10, %123, %81 : vector<8x64xi1>, vector<8x64xf32>
    %132 = tpu.concatenate %124, %125, %126, %127, %128, %129, %130, %131 in 0 : vector<8x64xf32>, vector<8x64xf32>, vector<8x64xf32>, vector<8x64xf32>, vector<8x64xf32>, vector<8x64xf32>, vector<8x64xf32>, vector<8x64xf32> -> vector<64x64xf32>
    %c272 = arith.constant 272 : index
    %c0_26 = arith.constant 0 : index
    %133 = vector.load %arg2[%c272, %c0_26] : memref<408x128xf32, #tpu.memory_space<vmem>>, vector<64x64xf32>
    %c402 = arith.constant 402 : index
    %c0_27 = arith.constant 0 : index
    %134 = vector.load %arg2[%c402, %c0_27] : memref<408x128xf32, #tpu.memory_space<vmem>>, vector<1x64xf32>
    %cst_28 = arith.constant dense<0.000000e+00> : vector<64x64xf32>
    %135 = tpu.matmul %132, %133, %cst_28 {dimension_numbers = #tpu.dot_dimension_numbers<[1], [0], [0], [1], [0, 0, 1, 1], [], []>} : vector<64x64xf32>, vector<64x64xf32>, vector<64x64xf32> -> vector<64x64xf32>
    %136 = vector.broadcast %134 : vector<1x64xf32> to vector<64x64xf32>
    %137 = arith.addf %135, %136 : vector<64x64xf32>
    %c208 = arith.constant 208 : index
    %c0_29 = arith.constant 0 : index
    %138 = vector.load %arg2[%c208, %c0_29] : memref<408x128xf32, #tpu.memory_space<vmem>>, vector<64x64xf32>
    %139 = vector.extract_strided_slice %137 {offsets = [0, 0], sizes = [8, 64], strides = [1, 1]} : vector<64x64xf32> to vector<8x64xf32>
    %140 = vector.extract_strided_slice %137 {offsets = [56, 0], sizes = [8, 64], strides = [1, 1]} : vector<64x64xf32> to vector<8x64xf32>
    %141 = arith.select %10, %139, %140 : vector<8x64xi1>, vector<8x64xf32>
    %142 = math.tanh %141 : vector<8x64xf32>
    %143 = vector.extract_strided_slice %137 {offsets = [8, 0], sizes = [8, 64], strides = [1, 1]} : vector<64x64xf32> to vector<8x64xf32>
    %144 = vector.extract_strided_slice %137 {offsets = [48, 0], sizes = [8, 64], strides = [1, 1]} : vector<64x64xf32> to vector<8x64xf32>
    %145 = arith.select %10, %143, %144 : vector<8x64xi1>, vector<8x64xf32>
    %cst_30 = arith.constant dense<0.000000e+00> : vector<8x64xf32>
    %146 = tpu.matmul %142, %138, %cst_30 {dimension_numbers = #tpu.dot_dimension_numbers<[1], [0], [0], [1], [0, 0, 1, 1], [], []>} : vector<8x64xf32>, vector<64x64xf32>, vector<8x64xf32> -> vector<8x64xf32>
    %147 = arith.addf %145, %146 : vector<8x64xf32>
    %148 = math.tanh %147 : vector<8x64xf32>
    %149 = vector.extract_strided_slice %137 {offsets = [16, 0], sizes = [8, 64], strides = [1, 1]} : vector<64x64xf32> to vector<8x64xf32>
    %150 = vector.extract_strided_slice %137 {offsets = [40, 0], sizes = [8, 64], strides = [1, 1]} : vector<64x64xf32> to vector<8x64xf32>
    %151 = arith.select %10, %149, %150 : vector<8x64xi1>, vector<8x64xf32>
    %cst_31 = arith.constant dense<0.000000e+00> : vector<8x64xf32>
    %152 = tpu.matmul %148, %138, %cst_31 {dimension_numbers = #tpu.dot_dimension_numbers<[1], [0], [0], [1], [0, 0, 1, 1], [], []>} : vector<8x64xf32>, vector<64x64xf32>, vector<8x64xf32> -> vector<8x64xf32>
    %153 = arith.addf %151, %152 : vector<8x64xf32>
    %154 = math.tanh %153 : vector<8x64xf32>
    %155 = vector.extract_strided_slice %137 {offsets = [24, 0], sizes = [8, 64], strides = [1, 1]} : vector<64x64xf32> to vector<8x64xf32>
    %156 = vector.extract_strided_slice %137 {offsets = [32, 0], sizes = [8, 64], strides = [1, 1]} : vector<64x64xf32> to vector<8x64xf32>
    %157 = arith.select %10, %155, %156 : vector<8x64xi1>, vector<8x64xf32>
    %cst_32 = arith.constant dense<0.000000e+00> : vector<8x64xf32>
    %158 = tpu.matmul %154, %138, %cst_32 {dimension_numbers = #tpu.dot_dimension_numbers<[1], [0], [0], [1], [0, 0, 1, 1], [], []>} : vector<8x64xf32>, vector<64x64xf32>, vector<8x64xf32> -> vector<8x64xf32>
    %159 = arith.addf %157, %158 : vector<8x64xf32>
    %160 = math.tanh %159 : vector<8x64xf32>
    %161 = vector.extract_strided_slice %137 {offsets = [32, 0], sizes = [8, 64], strides = [1, 1]} : vector<64x64xf32> to vector<8x64xf32>
    %162 = vector.extract_strided_slice %137 {offsets = [24, 0], sizes = [8, 64], strides = [1, 1]} : vector<64x64xf32> to vector<8x64xf32>
    %163 = arith.select %10, %161, %162 : vector<8x64xi1>, vector<8x64xf32>
    %cst_33 = arith.constant dense<0.000000e+00> : vector<8x64xf32>
    %164 = tpu.matmul %160, %138, %cst_33 {dimension_numbers = #tpu.dot_dimension_numbers<[1], [0], [0], [1], [0, 0, 1, 1], [], []>} : vector<8x64xf32>, vector<64x64xf32>, vector<8x64xf32> -> vector<8x64xf32>
    %165 = arith.addf %163, %164 : vector<8x64xf32>
    %166 = math.tanh %165 : vector<8x64xf32>
    %167 = vector.extract_strided_slice %137 {offsets = [40, 0], sizes = [8, 64], strides = [1, 1]} : vector<64x64xf32> to vector<8x64xf32>
    %168 = vector.extract_strided_slice %137 {offsets = [16, 0], sizes = [8, 64], strides = [1, 1]} : vector<64x64xf32> to vector<8x64xf32>
    %169 = arith.select %10, %167, %168 : vector<8x64xi1>, vector<8x64xf32>
    %cst_34 = arith.constant dense<0.000000e+00> : vector<8x64xf32>
    %170 = tpu.matmul %166, %138, %cst_34 {dimension_numbers = #tpu.dot_dimension_numbers<[1], [0], [0], [1], [0, 0, 1, 1], [], []>} : vector<8x64xf32>, vector<64x64xf32>, vector<8x64xf32> -> vector<8x64xf32>
    %171 = arith.addf %169, %170 : vector<8x64xf32>
    %172 = math.tanh %171 : vector<8x64xf32>
    %173 = vector.extract_strided_slice %137 {offsets = [48, 0], sizes = [8, 64], strides = [1, 1]} : vector<64x64xf32> to vector<8x64xf32>
    %174 = vector.extract_strided_slice %137 {offsets = [8, 0], sizes = [8, 64], strides = [1, 1]} : vector<64x64xf32> to vector<8x64xf32>
    %175 = arith.select %10, %173, %174 : vector<8x64xi1>, vector<8x64xf32>
    %cst_35 = arith.constant dense<0.000000e+00> : vector<8x64xf32>
    %176 = tpu.matmul %172, %138, %cst_35 {dimension_numbers = #tpu.dot_dimension_numbers<[1], [0], [0], [1], [0, 0, 1, 1], [], []>} : vector<8x64xf32>, vector<64x64xf32>, vector<8x64xf32> -> vector<8x64xf32>
    %177 = arith.addf %175, %176 : vector<8x64xf32>
    %178 = math.tanh %177 : vector<8x64xf32>
    %179 = vector.extract_strided_slice %137 {offsets = [56, 0], sizes = [8, 64], strides = [1, 1]} : vector<64x64xf32> to vector<8x64xf32>
    %180 = vector.extract_strided_slice %137 {offsets = [0, 0], sizes = [8, 64], strides = [1, 1]} : vector<64x64xf32> to vector<8x64xf32>
    %181 = arith.select %10, %179, %180 : vector<8x64xi1>, vector<8x64xf32>
    %cst_36 = arith.constant dense<0.000000e+00> : vector<8x64xf32>
    %182 = tpu.matmul %178, %138, %cst_36 {dimension_numbers = #tpu.dot_dimension_numbers<[1], [0], [0], [1], [0, 0, 1, 1], [], []>} : vector<8x64xf32>, vector<64x64xf32>, vector<8x64xf32> -> vector<8x64xf32>
    %183 = arith.addf %181, %182 : vector<8x64xf32>
    %184 = math.tanh %183 : vector<8x64xf32>
    %c336 = arith.constant 336 : index
    %c0_37 = arith.constant 0 : index
    %185 = vector.load %arg2[%c336, %c0_37] : memref<408x128xf32, #tpu.memory_space<vmem>>, vector<64x8xf32>
    %c403 = arith.constant 403 : index
    %c0_38 = arith.constant 0 : index
    %186 = vector.load %arg2[%c403, %c0_38] : memref<408x128xf32, #tpu.memory_space<vmem>>, vector<1x8xf32>
    %cst_39 = arith.constant dense<0.000000e+00> : vector<8x8xf32>
    %187 = tpu.matmul %184, %185, %cst_39 {dimension_numbers = #tpu.dot_dimension_numbers<[1], [0], [0], [1], [0, 0, 1, 1], [], []>} : vector<8x64xf32>, vector<64x8xf32>, vector<8x8xf32> -> vector<8x8xf32>
    %188 = vector.broadcast %186 : vector<1x8xf32> to vector<8x8xf32>
    %189 = arith.addf %187, %188 : vector<8x8xf32>
    %190 = vector.extract_strided_slice %189 {offsets = [0, 0], sizes = [2, 8], strides = [1, 1]} : vector<8x8xf32> to vector<2x8xf32>
    %c0_40 = arith.constant 0 : index
    %c0_41 = arith.constant 0 : index
    %191 = vector.load %arg3[%c0_40, %c0_41] : memref<2x8xf32, #tpu.memory_space<vmem>>, vector<2x8xf32>
    tpu.vector_store %arg3[%c0_40, %c0_41], %190 {strides = array<i32>} : memref<2x8xf32, #tpu.memory_space<vmem>>, vector<2x8xf32>,
    return
  }
}

</mosaic_0001>

<llo_original>
// kernel: _textrnn_fused.1
$region0: #{_textrnn_fused.1}
  #allocation0 [shape = 'u32[]', space=smem, size = 0x4, offset = 0x4, fixed_abs, tag = 'smem constant byte address 0x4 - core index']
  #allocation1 [shape = 'u32[72,128]{1,0:T(1,128)}', space=vmem, size = 0x9000, scoped, tag = 'internal scratch']
  %s0 = inlined_call_operand.vmem [shape: s32[64,1], index: 0, kind: input, shape index: {}]
  %s1 = inlined_call_operand.vmem [shape: f32[56,16], index: 1, kind: input, shape index: {}]
  %s2 = inlined_call_operand.hbm [shape: f32[408,128], index: 2, kind: input, shape index: {}]
  %s3 = inlined_call_operand.hbm [shape: f32[2,8], index: 3, kind: output, shape index: {}]
  %s4 = sld [smem:[#allocation0]]
  $region26: #{_textrnn_fused.1} parent=0
    _
  %s6 = ssub.s32 1, %s4
  %s7 = scalar_select 0, %s6, %s4
  $region1: #{_textrnn_fused.1} parent=0
    #allocation2 [shape = 'u8[208896]{0}', space=vmem, size = 0x33000, scoped, tag = 'input window, operand 2, single buffered']
    #allocation3 [shape = 's32[1]{0}', space=sflag, size = 0x4, scoped, tag = 'scoped memory for _textrnn_fused.1']
    #allocation4 [shape = 's32[1]{0}', space=sflag, size = 0x4, scoped, tag = 'scoped memory for _textrnn_fused.1']
    #allocation5 [shape = 'u8[1024]{0}', space=vmem, size = 0x400, scoped, tag = 'output window, operand 0, single buffered']
    %8 = vsyncpa [#allocation3], 0
    %9 = vsyncpa [#allocation4], 0
    // Predicated region
    $region2: #{_textrnn_fused.1} parent=1 // pred_check
      _
    $region3: #{_textrnn_fused.1} parent=1 // pred_check_branch
      %11 = sbr.rel (0) target = $region5
    $region4: #{_textrnn_fused.1} parent=1 // pred_region
      _
    $region5: #{_textrnn_fused.1} parent=1 // pred_fallthru
      _
    // Predicated region
    $region6: #{_textrnn_fused.1} parent=1 // pred_check
      _
    $region7: #{_textrnn_fused.1} parent=1 // pred_check_branch
      %13 = sbr.rel (0) target = $region9
    $region8: #{_textrnn_fused.1} parent=1 // pred_region
      _
    $region9: #{_textrnn_fused.1} parent=1 // pred_fallthru
      _
    // Predicated region
    $region10: #{_textrnn_fused.1} parent=1 // pred_check
      _
    $region11: #{_textrnn_fused.1} parent=1 // pred_check_branch
      %15 = sbr.rel (0) target = $region13
    $region12: #{_textrnn_fused.1} parent=1 // pred_region
      %17 = vsyncadd [#allocation3], 0
      %s18 = sshll.u32 %s2, 4
      %s19 = int_to_ptr.hbm [resolvable:$true] %s18
      %s20 = sshll.u32 [#allocation2], 4
      %s21 = int_to_ptr.vmem [resolvable:$true] %s20
      %26 = dma.hbm_to_vmem [thread:$0]  %s19, 6528, %s21, [#allocation3], 128, 128, 8
    $region13: #{_textrnn_fused.1} parent=1 // pred_fallthru
      _
    // Predicated region
    $region14: #{_textrnn_fused.1} parent=1 // pred_check
      _
    $region15: #{_textrnn_fused.1} parent=1 // pred_check_branch
      %28 = sbr.rel (0) target = $region17
    $region16: #{_textrnn_fused.1} parent=1 // pred_region
      %30 = dma.done [#allocation3], 6528
    $region17: #{_textrnn_fused.1} parent=1 // pred_fallthru
      _
    %v31 = vld [vmem:[%s0] sm:$0xff]
    %v32 = vld [vmem:[%s0 + $0x8] sm:$0xff]
    %v33 = vld [vmem:[%s0 + $0x10] sm:$0xff]
    %v34 = vld [vmem:[%s0 + $0x18] sm:$0xff]
    %v35 = vld [vmem:[%s0 + $0x20] sm:$0xff]
    %v36 = vld [vmem:[%s0 + $0x28] sm:$0xff]
    %v37 = vld [vmem:[%s0 + $0x30] sm:$0xff]
    %v38 = vld [vmem:[%s0 + $0x38] sm:$0xff]
    %v39 = vlaneseq
    %v40 = vand.u32 %v39, 127
    %41 = vset.pattern.permute.xlu0 0
    %42 = vperm.xlu0 %41, %v31
    %v43 = vpop.permute.xlu0 %42
    %44 = vset.pattern.permute.xlu0 0
    %45 = vperm.xlu0 %44, %v32
    %v46 = vpop.permute.xlu0 %45
    %47 = vset.pattern.permute.xlu0 0
    %48 = vperm.xlu0 %47, %v33
    %v49 = vpop.permute.xlu0 %48
    %50 = vset.pattern.permute.xlu0 0
    %51 = vperm.xlu0 %50, %v34
    %v52 = vpop.permute.xlu0 %51
    %53 = vset.pattern.permute.xlu0 0
    %54 = vperm.xlu0 %53, %v35
    %v55 = vpop.permute.xlu0 %54
    %56 = vset.pattern.permute.xlu0 0
    %57 = vperm.xlu0 %56, %v36
    %v58 = vpop.permute.xlu0 %57
    %59 = vset.pattern.permute.xlu0 0
    %60 = vperm.xlu0 %59, %v37
    %v61 = vpop.permute.xlu0 %60
    %62 = vset.pattern.permute.xlu0 0
    %63 = vperm.xlu0 %62, %v38
    %v64 = vpop.permute.xlu0 %63
    %vm65 = vcmp.eq.s32.totalorder %v40, %v43
    %vm66 = vcmp.eq.s32.totalorder %v40, %v46
    %vm67 = vcmp.eq.s32.totalorder %v40, %v49
    %vm68 = vcmp.eq.s32.totalorder %v40, %v52
    %vm69 = vcmp.eq.s32.totalorder %v40, %v55
    %vm70 = vcmp.eq.s32.totalorder %v40, %v58
    %vm71 = vcmp.eq.s32.totalorder %v40, %v61
    %vm72 = vcmp.eq.s32.totalorder %v40, %v64
    %v73 = vsel %vm65, 1, 0
    %v74 = vsel %vm66, 1, 0
    %v75 = vsel %vm67, 1, 0
    %v76 = vsel %vm68, 1, 0
    %v77 = vsel %vm69, 1, 0
    %v78 = vsel %vm70, 1, 0
    %v79 = vsel %vm71, 1, 0
    %v80 = vsel %vm72, 1, 0
    %v81 = vcvt.s32.f32 %v73
    %v82 = vcvt.s32.f32 %v74
    %v83 = vcvt.s32.f32 %v75
    %v84 = vcvt.s32.f32 %v76
    %v85 = vcvt.s32.f32 %v77
    %v86 = vcvt.s32.f32 %v78
    %v87 = vcvt.s32.f32 %v79
    %v88 = vcvt.s32.f32 %v80
    %v89 = vld [vmem:[%s1] sm:$0xff]
    %v90 = vld [vmem:[%s1 + $0x8] sm:$0xff]
    %v91 = vld [vmem:[%s1 + $0x10] sm:$0xff]
    %v92 = vld [vmem:[%s1 + $0x18] sm:$0xff]
    %v93 = vld [vmem:[%s1 + $0x20] sm:$0xff]
    %v94 = vld [vmem:[%s1 + $0x28] sm:$0xff]
    %v95 = vld [vmem:[%s1 + $0x30] sm:$0xff]
    %vm96 = vcmask 457728
    %v98 = vsel %vm96, %v81, 0
    %v101 = vsel %vm96, %v82, 0
    %v104 = vsel %vm96, %v83, 0
    %v107 = vsel %vm96, %v84, 0
    %v110 = vsel %vm96, %v85, 0
    %v113 = vsel %vm96, %v86, 0
    %v116 = vsel %vm96, %v87, 0
    %v119 = vsel %vm96, %v88, 0
    %121 = vmatpush.msra.mxu0 0.0
    %122 = vmatpush.msra.mxu0 0.0
    %123 = vmatpush.msra.mxu0 0.0
    %124 = vmatpush.msra.mxu0 0.0
    %125 = vmatpush.msra.mxu0 0.0
    %126 = vmatpush.msra.mxu0 0.0
    %127 = vmatpush.msra.mxu0 0.0
    %128 = vmatpush.msra.mxu0 0.0
    %129 = vmatpush.msra.mxu0 0.0
    %130 = vmatpush.msra.mxu0 %v95
    %131 = vmatpush.msra.mxu0 %v94
    %132 = vmatpush.msra.mxu0 %v93
    %133 = vmatpush.msra.mxu0 %v92
    %134 = vmatpush.msra.mxu0 %v91
    %135 = vmatpush.msra.mxu0 %v90
    %136 = vmatpush.msra.mxu0 %v89
    %137 = vmatmul.f32.gmra.mxu0 %v98
    %v138 = vpop.f32.mrf.mxu0
    %v139 = vadd.f32 0.0, %v138
    %140 = vmatmul.f32.gmra.mxu0 %v101
    %v141 = vpop.f32.mrf.mxu0
    %v142 = vadd.f32 0.0, %v141
    %143 = vmatmul.f32.gmra.mxu0 %v104
    %v144 = vpop.f32.mrf.mxu0
    %v145 = vadd.f32 0.0, %v144
    %146 = vmatmul.f32.gmra.mxu0 %v107
    %v147 = vpop.f32.mrf.mxu0
    %v148 = vadd.f32 0.0, %v147
    %149 = vmatmul.f32.gmra.mxu0 %v110
    %v150 = vpop.f32.mrf.mxu0
    %v151 = vadd.f32 0.0, %v150
    %152 = vmatmul.f32.gmra.mxu0 %v113
    %v153 = vpop.f32.mrf.mxu0
    %v154 = vadd.f32 0.0, %v153
    %155 = vmatmul.f32.gmra.mxu0 %v116
    %v156 = vpop.f32.mrf.mxu0
    %v157 = vadd.f32 0.0, %v156
    %158 = vmatmul.f32.gmra.mxu0 %v119
    %v159 = vpop.f32.mrf.mxu0
    %v160 = vadd.f32 0.0, %v159
    %161 = vdwg.mxu0
    %vm162 = vcmp.lt.s32.totalorder %v40, 32
    %v163 = vld [vmem:[#allocation2 + $0x40] sm:$0xff]
    %v164 = vld [vmem:[#allocation2 + $0x48] sm:$0xff]
    %v165 = vld [vmem:[#allocation2 + $0x190] sm:$0x1]
    %v166 = vperm.slane %v165, 0
    %vm167 = vcmask 130048
    %v169 = vsel %vm167, %v139, 0
    %v172 = vsel %vm167, %v142, 0
    %v175 = vsel %vm167, %v145, 0
    %v178 = vsel %vm167, %v148, 0
    %v181 = vsel %vm167, %v151, 0
    %v184 = vsel %vm167, %v154, 0
    %v187 = vsel %vm167, %v157, 0
    %v190 = vsel %vm167, %v160, 0
    %192 = vmatpush.msra.mxu0 0.0
    %193 = vmatpush.msra.mxu0 0.0
    %194 = vmatpush.msra.mxu0 0.0
    %195 = vmatpush.msra.mxu0 0.0
    %196 = vmatpush.msra.mxu0 0.0
    %197 = vmatpush.msra.mxu0 0.0
    %198 = vmatpush.msra.mxu0 0.0
    %199 = vmatpush.msra.mxu0 0.0
    %200 = vmatpush.msra.mxu0 0.0
    %201 = vmatpush.msra.mxu0 0.0
    %202 = vmatpush.msra.mxu0 0.0
    %203 = vmatpush.msra.mxu0 0.0
    %204 = vmatpush.msra.mxu0 0.0
    %205 = vmatpush.msra.mxu0 0.0
    %206 = vmatpush.msra.mxu0 %v164
    %207 = vmatpush.msra.mxu0 %v163
    %208 = vmatmul.f32.gmra.mxu0 %v169
    %v209 = vpop.f32.mrf.mxu0
    %v210 = vadd.f32 %v166, %v209
    %211 = vmatmul.f32.gmra.mxu0 %v172
    %v212 = vpop.f32.mrf.mxu0
    %v213 = vadd.f32 %v166, %v212
    %214 = vmatmul.f32.gmra.mxu0 %v175
    %v215 = vpop.f32.mrf.mxu0
    %v216 = vadd.f32 %v166, %v215
    %217 = vmatmul.f32.gmra.mxu0 %v178
    %v218 = vpop.f32.mrf.mxu0
    %v219 = vadd.f32 %v166, %v218
    %220 = vmatmul.f32.gmra.mxu0 %v181
    %v221 = vpop.f32.mrf.mxu0
    %v222 = vadd.f32 %v166, %v221
    %223 = vmatmul.f32.gmra.mxu0 %v184
    %v224 = vpop.f32.mrf.mxu0
    %v225 = vadd.f32 %v166, %v224
    %226 = vmatmul.f32.gmra.mxu0 %v187
    %v227 = vpop.f32.mrf.mxu0
    %v228 = vadd.f32 %v166, %v227
    %229 = vmatmul.f32.gmra.mxu0 %v190
    %v230 = vpop.f32.mrf.mxu0
    %v231 = vadd.f32 %v166, %v230
    %232 = vdwg.mxu0
    %v233 = vld [vmem:[#allocation2] sm:$0xff]
    %v234 = vld [vmem:[#allocation2 + $0x8] sm:$0xff]
    %v235 = vld [vmem:[#allocation2 + $0x10] sm:$0xff]
    %v236 = vld [vmem:[#allocation2 + $0x18] sm:$0xff]
    %v237 = vld [vmem:[#allocation2 + $0x20] sm:$0xff]
    %v238 = vld [vmem:[#allocation2 + $0x28] sm:$0xff]
    %v239 = vld [vmem:[#allocation2 + $0x30] sm:$0xff]
    %v240 = vld [vmem:[#allocation2 + $0x38] sm:$0xff]
    %v241 = vsel %vm162, %v210, %v231
    %v242 = vtanh.pop %v241
    %v243 = vsel %vm162, %v213, %v228
    %vm244 = vcmask 523264
    %v246 = vsel %vm244, %v242, 0
    %248 = vmatpush.msra.mxu0 0.0
    %249 = vmatpush.msra.mxu0 0.0
    %250 = vmatpush.msra.mxu0 0.0
    %251 = vmatpush.msra.mxu0 0.0
    %252 = vmatpush.msra.mxu0 0.0
    %253 = vmatpush.msra.mxu0 0.0
    %254 = vmatpush.msra.mxu0 0.0
    %255 = vmatpush.msra.mxu0 0.0
    %256 = vmatpush.msra.mxu0 %v240
    %257 = vmatpush.msra.mxu0 %v239
    %258 = vmatpush.msra.mxu0 %v238
    %259 = vmatpush.msra.mxu0 %v237
    %260 = vmatpush.msra.mxu0 %v236
    %261 = vmatpush.msra.mxu0 %v235
    %262 = vmatpush.msra.mxu0 %v234
    %263 = vmatpush.msra.mxu0 %v233
    %264 = vmatmul.f32.gmra.mxu0 %v246
    %v265 = vpop.f32.mrf.mxu0
    %v266 = vadd.f32 0.0, %v265
    %267 = vdwg.mxu0
    %v268 = vadd.f32 %v243, %v266
    %v269 = vtanh.pop %v268
    %v270 = vsel %vm162, %v216, %v225
    %v272 = vsel %vm244, %v269, 0
    %274 = vmatpush.msra.mxu0 0.0
    %275 = vmatpush.msra.mxu0 0.0
    %276 = vmatpush.msra.mxu0 0.0
    %277 = vmatpush.msra.mxu0 0.0
    %278 = vmatpush.msra.mxu0 0.0
    %279 = vmatpush.msra.mxu0 0.0
    %280 = vmatpush.msra.mxu0 0.0
    %281 = vmatpush.msra.mxu0 0.0
    %282 = vmatpush.msra.mxu0 %v240
    %283 = vmatpush.msra.mxu0 %v239
    %284 = vmatpush.msra.mxu0 %v238
    %285 = vmatpush.msra.mxu0 %v237
    %286 = vmatpush.msra.mxu0 %v236
    %287 = vmatpush.msra.mxu0 %v235
    %288 = vmatpush.msra.mxu0 %v234
    %289 = vmatpush.msra.mxu0 %v233
    %290 = vmatmul.f32.gmra.mxu0 %v272
    %v291 = vpop.f32.mrf.mxu0
    %v292 = vadd.f32 0.0, %v291
    %293 = vdwg.mxu0
    %v294 = vadd.f32 %v270, %v292
    %v295 = vtanh.pop %v294
    %v296 = vsel %vm162, %v219, %v222
    %v298 = vsel %vm244, %v295, 0
    %300 = vmatpush.msra.mxu0 0.0
    %301 = vmatpush.msra.mxu0 0.0
    %302 = vmatpush.msra.mxu0 0.0
    %303 = vmatpush.msra.mxu0 0.0
    %304 = vmatpush.msra.mxu0 0.0
    %305 = vmatpush.msra.mxu0 0.0
    %306 = vmatpush.msra.mxu0 0.0
    %307 = vmatpush.msra.mxu0 0.0
    %308 = vmatpush.msra.mxu0 %v240
    %309 = vmatpush.msra.mxu0 %v239
    %310 = vmatpush.msra.mxu0 %v238
    %311 = vmatpush.msra.mxu0 %v237
    %312 = vmatpush.msra.mxu0 %v236
    %313 = vmatpush.msra.mxu0 %v235
    %314 = vmatpush.msra.mxu0 %v234
    %315 = vmatpush.msra.mxu0 %v233
    %316 = vmatmul.f32.gmra.mxu0 %v298
    %v317 = vpop.f32.mrf.mxu0
    %v318 = vadd.f32 0.0, %v317
    %319 = vdwg.mxu0
    %v320 = vadd.f32 %v296, %v318
    %v321 = vtanh.pop %v320
    %v322 = vsel %vm162, %v222, %v219
    %v324 = vsel %vm244, %v321, 0
    %326 = vmatpush.msra.mxu0 0.0
    %327 = vmatpush.msra.mxu0 0.0
    %328 = vmatpush.msra.mxu0 0.0
    %329 = vmatpush.msra.mxu0 0.0
    %330 = vmatpush.msra.mxu0 0.0
    %331 = vmatpush.msra.mxu0 0.0
    %332 = vmatpush.msra.mxu0 0.0
    %333 = vmatpush.msra.mxu0 0.0
    %334 = vmatpush.msra.mxu0 %v240
    %335 = vmatpush.msra.mxu0 %v239
    %336 = vmatpush.msra.mxu0 %v238
    %337 = vmatpush.msra.mxu0 %v237
    %338 = vmatpush.msra.mxu0 %v236
    %339 = vmatpush.msra.mxu0 %v235
    %340 = vmatpush.msra.mxu0 %v234
    %341 = vmatpush.msra.mxu0 %v233
    %342 = vmatmul.f32.gmra.mxu0 %v324
    %v343 = vpop.f32.mrf.mxu0
    %v344 = vadd.f32 0.0, %v343
    %345 = vdwg.mxu0
    %v346 = vadd.f32 %v322, %v344
    %v347 = vtanh.pop %v346
    %v348 = vsel %vm162, %v225, %v216
    %v350 = vsel %vm244, %v347, 0
    %352 = vmatpush.msra.mxu0 0.0
    %353 = vmatpush.msra.mxu0 0.0
    %354 = vmatpush.msra.mxu0 0.0
    %355 = vmatpush.msra.mxu0 0.0
    %356 = vmatpush.msra.mxu0 0.0
    %357 = vmatpush.msra.mxu0 0.0
    %358 = vmatpush.msra.mxu0 0.0
    %359 = vmatpush.msra.mxu0 0.0
    %360 = vmatpush.msra.mxu0 %v240
    %361 = vmatpush.msra.mxu0 %v239
    %362 = vmatpush.msra.mxu0 %v238
    %363 = vmatpush.msra.mxu0 %v237
    %364 = vmatpush.msra.mxu0 %v236
    %365 = vmatpush.msra.mxu0 %v235
    %366 = vmatpush.msra.mxu0 %v234
    %367 = vmatpush.msra.mxu0 %v233
    %368 = vmatmul.f32.gmra.mxu0 %v350
    %v369 = vpop.f32.mrf.mxu0
    %v370 = vadd.f32 0.0, %v369
    %371 = vdwg.mxu0
    %v372 = vadd.f32 %v348, %v370
    %v373 = vtanh.pop %v372
    %v374 = vsel %vm162, %v228, %v213
    %v376 = vsel %vm244, %v373, 0
    %378 = vmatpush.msra.mxu0 0.0
    %379 = vmatpush.msra.mxu0 0.0
    %380 = vmatpush.msra.mxu0 0.0
    %381 = vmatpush.msra.mxu0 0.0
    %382 = vmatpush.msra.mxu0 0.0
    %383 = vmatpush.msra.mxu0 0.0
    %384 = vmatpush.msra.mxu0 0.0
    %385 = vmatpush.msra.mxu0 0.0
    %386 = vmatpush.msra.mxu0 %v240
    %387 = vmatpush.msra.mxu0 %v239
    %388 = vmatpush.msra.mxu0 %v238
    %389 = vmatpush.msra.mxu0 %v237
    %390 = vmatpush.msra.mxu0 %v236
    %391 = vmatpush.msra.mxu0 %v235
    %392 = vmatpush.msra.mxu0 %v234
    %393 = vmatpush.msra.mxu0 %v233
    %394 = vmatmul.f32.gmra.mxu0 %v376
    %v395 = vpop.f32.mrf.mxu0
    %v396 = vadd.f32 0.0, %v395
    %397 = vdwg.mxu0
    %v398 = vadd.f32 %v374, %v396
    %v399 = vtanh.pop %v398
    %v400 = vsel %vm162, %v231, %v210
    %v402 = vsel %vm244, %v399, 0
    %404 = vmatpush.msra.mxu0 0.0
    %405 = vmatpush.msra.mxu0 0.0
    %406 = vmatpush.msra.mxu0 0.0
    %407 = vmatpush.msra.mxu0 0.0
    %408 = vmatpush.msra.mxu0 0.0
    %409 = vmatpush.msra.mxu0 0.0
    %410 = vmatpush.msra.mxu0 0.0
    %411 = vmatpush.msra.mxu0 0.0
    %412 = vmatpush.msra.mxu0 %v240
    %413 = vmatpush.msra.mxu0 %v239
    %414 = vmatpush.msra.mxu0 %v238
    %415 = vmatpush.msra.mxu0 %v237
    %416 = vmatpush.msra.mxu0 %v236
    %417 = vmatpush.msra.mxu0 %v235
    %418 = vmatpush.msra.mxu0 %v234
    %419 = vmatpush.msra.mxu0 %v233
    %420 = vmatmul.f32.gmra.mxu0 %v402
    %v421 = vpop.f32.mrf.mxu0
    %v422 = vadd.f32 0.0, %v421
    %423 = vdwg.mxu0
    %v424 = vadd.f32 %v400, %v422
    %v425 = vtanh.pop %v424
    %v426 = vsel %vm162, %v242, %v425
    %v427 = vsel %vm162, %v269, %v399
    %v428 = vsel %vm162, %v295, %v373
    %v429 = vsel %vm162, %v321, %v347
    %v430 = vsel %vm162, %v347, %v321
    %v431 = vsel %vm162, %v373, %v295
    %v432 = vsel %vm162, %v399, %v269
    %v433 = vsel %vm162, %v425, %v242
    %v434 = vld [vmem:[#allocation2 + $0x90] sm:$0xff]
    %v435 = vld [vmem:[#allocation2 + $0x98] sm:$0xff]
    %v436 = vld [vmem:[#allocation2 + $0xa0] sm:$0xff]
    %v437 = vld [vmem:[#allocation2 + $0xa8] sm:$0xff]
    %v438 = vld [vmem:[#allocation2 + $0xb0] sm:$0xff]
    %v439 = vld [vmem:[#allocation2 + $0xb8] sm:$0xff]
    %v440 = vld [vmem:[#allocation2 + $0xc0] sm:$0xff]
    %v441 = vld [vmem:[#allocation2 + $0xc8] sm:$0xff]
    %v442 = vld [vmem:[#allocation2 + $0x191] sm:$0x1]
    %v443 = vperm.slane %v442, 0
    %v445 = vsel %vm244, %v426, 0
    %v448 = vsel %vm244, %v427, 0
    %v451 = vsel %vm244, %v428, 0
    %v454 = vsel %vm244, %v429, 0
    %v457 = vsel %vm244, %v430, 0
    %v460 = vsel %vm244, %v431, 0
    %v463 = vsel %vm244, %v432, 0
    %v466 = vsel %vm244, %v433, 0
    %468 = vmatpush.msra.mxu0 0.0
    %469 = vmatpush.msra.mxu0 0.0
    %470 = vmatpush.msra.mxu0 0.0
    %471 = vmatpush.msra.mxu0 0.0
    %472 = vmatpush.msra.mxu0 0.0
    %473 = vmatpush.msra.mxu0 0.0
    %474 = vmatpush.msra.mxu0 0.0
    %475 = vmatpush.msra.mxu0 0.0
    %476 = vmatpush.msra.mxu0 %v441
    %477 = vmatpush.msra.mxu0 %v440
    %478 = vmatpush.msra.mxu0 %v439
    %479 = vmatpush.msra.mxu0 %v438
    %480 = vmatpush.msra.mxu0 %v437
    %481 = vmatpush.msra.mxu0 %v436
    %482 = vmatpush.msra.mxu0 %v435
    %483 = vmatpush.msra.mxu0 %v434
    %484 = vmatmul.f32.gmra.mxu0 %v445
    %v485 = vpop.f32.mrf.mxu0
    %v486 = vadd.f32 %v443, %v485
    %487 = vmatmul.f32.gmra.mxu0 %v448
    %v488 = vpop.f32.mrf.mxu0
    %v489 = vadd.f32 %v443, %v488
    %490 = vmatmul.f32.gmra.mxu0 %v451
    %v491 = vpop.f32.mrf.mxu0
    %v492 = vadd.f32 %v443, %v491
    %493 = vmatmul.f32.gmra.mxu0 %v454
    %v494 = vpop.f32.mrf.mxu0
    %v495 = vadd.f32 %v443, %v494
    %496 = vmatmul.f32.gmra.mxu0 %v457
    %v497 = vpop.f32.mrf.mxu0
    %v498 = vadd.f32 %v443, %v497
    %499 = vmatmul.f32.gmra.mxu0 %v460
    %v500 = vpop.f32.mrf.mxu0
    %v501 = vadd.f32 %v443, %v500
    %502 = vmatmul.f32.gmra.mxu0 %v463
    %v503 = vpop.f32.mrf.mxu0
    %v504 = vadd.f32 %v443, %v503
    %505 = vmatmul.f32.gmra.mxu0 %v466
    %v506 = vpop.f32.mrf.mxu0
    %v507 = vadd.f32 %v443, %v506
    %508 = vdwg.mxu0
    %v509 = vld [vmem:[#allocation2 + $0x50] sm:$0xff]
    %v510 = vld [vmem:[#allocation2 + $0x58] sm:$0xff]
    %v511 = vld [vmem:[#allocation2 + $0x60] sm:$0xff]
    %v512 = vld [vmem:[#allocation2 + $0x68] sm:$0xff]
    %v513 = vld [vmem:[#allocation2 + $0x70] sm:$0xff]
    %v514 = vld [vmem:[#allocation2 + $0x78] sm:$0xff]
    %v515 = vld [vmem:[#allocation2 + $0x80] sm:$0xff]
    %v516 = vld [vmem:[#allocation2 + $0x88] sm:$0xff]
    %v517 = vsel %vm162, %v486, %v507
    %v518 = vtanh.pop %v517
    %v519 = vsel %vm162, %v489, %v504
    %v521 = vsel %vm244, %v518, 0
    %523 = vmatpush.msra.mxu0 0.0
    %524 = vmatpush.msra.mxu0 0.0
    %525 = vmatpush.msra.mxu0 0.0
    %526 = vmatpush.msra.mxu0 0.0
    %527 = vmatpush.msra.mxu0 0.0
    %528 = vmatpush.msra.mxu0 0.0
    %529 = vmatpush.msra.mxu0 0.0
    %530 = vmatpush.msra.mxu0 0.0
    %531 = vmatpush.msra.mxu0 %v516
    %532 = vmatpush.msra.mxu0 %v515
    %533 = vmatpush.msra.mxu0 %v514
    %534 = vmatpush.msra.mxu0 %v513
    %535 = vmatpush.msra.mxu0 %v512
    %536 = vmatpush.msra.mxu0 %v511
    %537 = vmatpush.msra.mxu0 %v510
    %538 = vmatpush.msra.mxu0 %v509
    %539 = vmatmul.f32.gmra.mxu0 %v521
    %v540 = vpop.f32.mrf.mxu0
    %v541 = vadd.f32 0.0, %v540
    %542 = vdwg.mxu0
    %v543 = vadd.f32 %v519, %v541
    %v544 = vtanh.pop %v543
    %v545 = vsel %vm162, %v492, %v501
    %v547 = vsel %vm244, %v544, 0
    %549 = vmatpush.msra.mxu0 0.0
    %550 = vmatpush.msra.mxu0 0.0
    %551 = vmatpush.msra.mxu0 0.0
    %552 = vmatpush.msra.mxu0 0.0
    %553 = vmatpush.msra.mxu0 0.0
    %554 = vmatpush.msra.mxu0 0.0
    %555 = vmatpush.msra.mxu0 0.0
    %556 = vmatpush.msra.mxu0 0.0
    %557 = vmatpush.msra.mxu0 %v516
    %558 = vmatpush.msra.mxu0 %v515
    %559 = vmatpush.msra.mxu0 %v514
    %560 = vmatpush.msra.mxu0 %v513
    %561 = vmatpush.msra.mxu0 %v512
    %562 = vmatpush.msra.mxu0 %v511
    %563 = vmatpush.msra.mxu0 %v510
    %564 = vmatpush.msra.mxu0 %v509
    %565 = vmatmul.f32.gmra.mxu0 %v547
    %v566 = vpop.f32.mrf.mxu0
    %v567 = vadd.f32 0.0, %v566
    %568 = vdwg.mxu0
    %v569 = vadd.f32 %v545, %v567
    %v570 = vtanh.pop %v569
    %v571 = vsel %vm162, %v495, %v498
    %v573 = vsel %vm244, %v570, 0
    %575 = vmatpush.msra.mxu0 0.0
    %576 = vmatpush.msra.mxu0 0.0
    %577 = vmatpush.msra.mxu0 0.0
    %578 = vmatpush.msra.mxu0 0.0
    %579 = vmatpush.msra.mxu0 0.0
    %580 = vmatpush.msra.mxu0 0.0
    %581 = vmatpush.msra.mxu0 0.0
    %582 = vmatpush.msra.mxu0 0.0
    %583 = vmatpush.msra.mxu0 %v516
    %584 = vmatpush.msra.mxu0 %v515
    %585 = vmatpush.msra.mxu0 %v514
    %586 = vmatpush.msra.mxu0 %v513
    %587 = vmatpush.msra.mxu0 %v512
    %588 = vmatpush.msra.mxu0 %v511
    %589 = vmatpush.msra.mxu0 %v510
    %590 = vmatpush.msra.mxu0 %v509
    %591 = vmatmul.f32.gmra.mxu0 %v573
    %v592 = vpop.f32.mrf.mxu0
    %v593 = vadd.f32 0.0, %v592
    %594 = vdwg.mxu0
    %v595 = vadd.f32 %v571, %v593
    %v596 = vtanh.pop %v595
    %v597 = vsel %vm162, %v498, %v495
    %v599 = vsel %vm244, %v596, 0
    %601 = vmatpush.msra.mxu0 0.0
    %602 = vmatpush.msra.mxu0 0.0
    %603 = vmatpush.msra.mxu0 0.0
    %604 = vmatpush.msra.mxu0 0.0
    %605 = vmatpush.msra.mxu0 0.0
    %606 = vmatpush.msra.mxu0 0.0
    %607 = vmatpush.msra.mxu0 0.0
    %608 = vmatpush.msra.mxu0 0.0
    %609 = vmatpush.msra.mxu0 %v516
    %610 = vmatpush.msra.mxu0 %v515
    %611 = vmatpush.msra.mxu0 %v514
    %612 = vmatpush.msra.mxu0 %v513
    %613 = vmatpush.msra.mxu0 %v512
    %614 = vmatpush.msra.mxu0 %v511
    %615 = vmatpush.msra.mxu0 %v510
    %616 = vmatpush.msra.mxu0 %v509
    %617 = vmatmul.f32.gmra.mxu0 %v599
    %v618 = vpop.f32.mrf.mxu0
    %v619 = vadd.f32 0.0, %v618
    %620 = vdwg.mxu0
    %v621 = vadd.f32 %v597, %v619
    %v622 = vtanh.pop %v621
    %v623 = vsel %vm162, %v501, %v492
    %v625 = vsel %vm244, %v622, 0
    %627 = vmatpush.msra.mxu0 0.0
    %628 = vmatpush.msra.mxu0 0.0
    %629 = vmatpush.msra.mxu0 0.0
    %630 = vmatpush.msra.mxu0 0.0
    %631 = vmatpush.msra.mxu0 0.0
    %632 = vmatpush.msra.mxu0 0.0
    %633 = vmatpush.msra.mxu0 0.0
    %634 = vmatpush.msra.mxu0 0.0
    %635 = vmatpush.msra.mxu0 %v516
    %636 = vmatpush.msra.mxu0 %v515
    %637 = vmatpush.msra.mxu0 %v514
    %638 = vmatpush.msra.mxu0 %v513
    %639 = vmatpush.msra.mxu0 %v512
    %640 = vmatpush.msra.mxu0 %v511
    %641 = vmatpush.msra.mxu0 %v510
    %642 = vmatpush.msra.mxu0 %v509
    %643 = vmatmul.f32.gmra.mxu0 %v625
    %v644 = vpop.f32.mrf.mxu0
    %v645 = vadd.f32 0.0, %v644
    %646 = vdwg.mxu0
    %v647 = vadd.f32 %v623, %v645
    %v648 = vtanh.pop %v647
    %v649 = vsel %vm162, %v504, %v489
    %v651 = vsel %vm244, %v648, 0
    %653 = vmatpush.msra.mxu0 0.0
    %654 = vmatpush.msra.mxu0 0.0
    %655 = vmatpush.msra.mxu0 0.0
    %656 = vmatpush.msra.mxu0 0.0
    %657 = vmatpush.msra.mxu0 0.0
    %658 = vmatpush.msra.mxu0 0.0
    %659 = vmatpush.msra.mxu0 0.0
    %660 = vmatpush.msra.mxu0 0.0
    %661 = vmatpush.msra.mxu0 %v516
    %662 = vmatpush.msra.mxu0 %v515
    %663 = vmatpush.msra.mxu0 %v514
    %664 = vmatpush.msra.mxu0 %v513
    %665 = vmatpush.msra.mxu0 %v512
    %666 = vmatpush.msra.mxu0 %v511
    %667 = vmatpush.msra.mxu0 %v510
    %668 = vmatpush.msra.mxu0 %v509
    %669 = vmatmul.f32.gmra.mxu0 %v651
    %v670 = vpop.f32.mrf.mxu0
    %v671 = vadd.f32 0.0, %v670
    %672 = vdwg.mxu0
    %v673 = vadd.f32 %v649, %v671
    %v674 = vtanh.pop %v673
    %v675 = vsel %vm162, %v507, %v486
    %v677 = vsel %vm244, %v674, 0
    %679 = vmatpush.msra.mxu0 0.0
    %680 = vmatpush.msra.mxu0 0.0
    %681 = vmatpush.msra.mxu0 0.0
    %682 = vmatpush.msra.mxu0 0.0
    %683 = vmatpush.msra.mxu0 0.0
    %684 = vmatpush.msra.mxu0 0.0
    %685 = vmatpush.msra.mxu0 0.0
    %686 = vmatpush.msra.mxu0 0.0
    %687 = vmatpush.msra.mxu0 %v516
    %688 = vmatpush.msra.mxu0 %v515
    %689 = vmatpush.msra.mxu0 %v514
    %690 = vmatpush.msra.mxu0 %v513
    %691 = vmatpush.msra.mxu0 %v512
    %692 = vmatpush.msra.mxu0 %v511
    %693 = vmatpush.msra.mxu0 %v510
    %694 = vmatpush.msra.mxu0 %v509
    %695 = vmatmul.f32.gmra.mxu0 %v677
    %v696 = vpop.f32.mrf.mxu0
    %v697 = vadd.f32 0.0, %v696
    %698 = vdwg.mxu0
    %v699 = vadd.f32 %v675, %v697
    %v700 = vtanh.pop %v699
    %v701 = vsel %vm162, %v518, %v700
    %v702 = vsel %vm162, %v544, %v674
    %v703 = vsel %vm162, %v570, %v648
    %v704 = vsel %vm162, %v596, %v622
    %v705 = vsel %vm162, %v622, %v596
    %v706 = vsel %vm162, %v648, %v570
    %v707 = vsel %vm162, %v674, %v544
    %v708 = vsel %vm162, %v700, %v518
    %v709 = vld [vmem:[#allocation2 + $0x110] sm:$0xff]
    %v710 = vld [vmem:[#allocation2 + $0x118] sm:$0xff]
    %v711 = vld [vmem:[#allocation2 + $0x120] sm:$0xff]
    %v712 = vld [vmem:[#allocation2 + $0x128] sm:$0xff]
    %v713 = vld [vmem:[#allocation2 + $0x130] sm:$0xff]
    %v714 = vld [vmem:[#allocation2 + $0x138] sm:$0xff]
    %v715 = vld [vmem:[#allocation2 + $0x140] sm:$0xff]
    %v716 = vld [vmem:[#allocation2 + $0x148] sm:$0xff]
    %v717 = vld [vmem:[#allocation2 + $0x192] sm:$0x1]
    %v718 = vperm.slane %v717, 0
    %v720 = vsel %vm244, %v701, 0
    %v723 = vsel %vm244, %v702, 0
    %v726 = vsel %vm244, %v703, 0
    %v729 = vsel %vm244, %v704, 0
    %v732 = vsel %vm244, %v705, 0
    %v735 = vsel %vm244, %v706, 0
    %v738 = vsel %vm244, %v707, 0
    %v741 = vsel %vm244, %v708, 0
    %743 = vmatpush.msra.mxu0 0.0
    %744 = vmatpush.msra.mxu0 0.0
    %745 = vmatpush.msra.mxu0 0.0
    %746 = vmatpush.msra.mxu0 0.0
    %747 = vmatpush.msra.mxu0 0.0
    %748 = vmatpush.msra.mxu0 0.0
    %749 = vmatpush.msra.mxu0 0.0
    %750 = vmatpush.msra.mxu0 0.0
    %751 = vmatpush.msra.mxu0 %v716
    %752 = vmatpush.msra.mxu0 %v715
    %753 = vmatpush.msra.mxu0 %v714
    %754 = vmatpush.msra.mxu0 %v713
    %755 = vmatpush.msra.mxu0 %v712
    %756 = vmatpush.msra.mxu0 %v711
    %757 = vmatpush.msra.mxu0 %v710
    %758 = vmatpush.msra.mxu0 %v709
    %759 = vmatmul.f32.gmra.mxu0 %v720
    %v760 = vpop.f32.mrf.mxu0
    %v761 = vadd.f32 %v718, %v760
    %762 = vmatmul.f32.gmra.mxu0 %v723
    %v763 = vpop.f32.mrf.mxu0
    %v764 = vadd.f32 %v718, %v763
    %765 = vmatmul.f32.gmra.mxu0 %v726
    %v766 = vpop.f32.mrf.mxu0
    %v767 = vadd.f32 %v718, %v766
    %768 = vmatmul.f32.gmra.mxu0 %v729
    %v769 = vpop.f32.mrf.mxu0
    %v770 = vadd.f32 %v718, %v769
    %771 = vmatmul.f32.gmra.mxu0 %v732
    %v772 = vpop.f32.mrf.mxu0
    %v773 = vadd.f32 %v718, %v772
    %774 = vmatmul.f32.gmra.mxu0 %v735
    %v775 = vpop.f32.mrf.mxu0
    %v776 = vadd.f32 %v718, %v775
    %777 = vmatmul.f32.gmra.mxu0 %v738
    %v778 = vpop.f32.mrf.mxu0
    %v779 = vadd.f32 %v718, %v778
    %780 = vmatmul.f32.gmra.mxu0 %v741
    %v781 = vpop.f32.mrf.mxu0
    %v782 = vadd.f32 %v718, %v781
    %783 = vdwg.mxu0
    %v784 = vld [vmem:[#allocation2 + $0xd0] sm:$0xff]
    %v785 = vld [vmem:[#allocation2 + $0xd8] sm:$0xff]
    %v786 = vld [vmem:[#allocation2 + $0xe0] sm:$0xff]
    %v787 = vld [vmem:[#allocation2 + $0xe8] sm:$0xff]
    %v788 = vld [vmem:[#allocation2 + $0xf0] sm:$0xff]
    %v789 = vld [vmem:[#allocation2 + $0xf8] sm:$0xff]
    %v790 = vld [vmem:[#allocation2 + $0x100] sm:$0xff]
    %v791 = vld [vmem:[#allocation2 + $0x108] sm:$0xff]
    %v792 = vsel %vm162, %v761, %v782
    %v793 = vtanh.pop %v792
    %v794 = vsel %vm162, %v764, %v779
    %v796 = vsel %vm244, %v793, 0
    %798 = vmatpush.msra.mxu0 0.0
    %799 = vmatpush.msra.mxu0 0.0
    %800 = vmatpush.msra.mxu0 0.0
    %801 = vmatpush.msra.mxu0 0.0
    %802 = vmatpush.msra.mxu0 0.0
    %803 = vmatpush.msra.mxu0 0.0
    %804 = vmatpush.msra.mxu0 0.0
    %805 = vmatpush.msra.mxu0 0.0
    %806 = vmatpush.msra.mxu0 %v791
    %807 = vmatpush.msra.mxu0 %v790
    %808 = vmatpush.msra.mxu0 %v789
    %809 = vmatpush.msra.mxu0 %v788
    %810 = vmatpush.msra.mxu0 %v787
    %811 = vmatpush.msra.mxu0 %v786
    %812 = vmatpush.msra.mxu0 %v785
    %813 = vmatpush.msra.mxu0 %v784
    %814 = vmatmul.f32.gmra.mxu0 %v796
    %v815 = vpop.f32.mrf.mxu0
    %v816 = vadd.f32 0.0, %v815
    %817 = vdwg.mxu0
    %v818 = vadd.f32 %v794, %v816
    %v819 = vtanh.pop %v818
    %v820 = vsel %vm162, %v767, %v776
    %v822 = vsel %vm244, %v819, 0
    %824 = vmatpush.msra.mxu0 0.0
    %825 = vmatpush.msra.mxu0 0.0
    %826 = vmatpush.msra.mxu0 0.0
    %827 = vmatpush.msra.mxu0 0.0
    %828 = vmatpush.msra.mxu0 0.0
    %829 = vmatpush.msra.mxu0 0.0
    %830 = vmatpush.msra.mxu0 0.0
    %831 = vmatpush.msra.mxu0 0.0
    %832 = vmatpush.msra.mxu0 %v791
    %833 = vmatpush.msra.mxu0 %v790
    %834 = vmatpush.msra.mxu0 %v789
    %835 = vmatpush.msra.mxu0 %v788
    %836 = vmatpush.msra.mxu0 %v787
    %837 = vmatpush.msra.mxu0 %v786
    %838 = vmatpush.msra.mxu0 %v785
    %839 = vmatpush.msra.mxu0 %v784
    %840 = vmatmul.f32.gmra.mxu0 %v822
    %v841 = vpop.f32.mrf.mxu0
    %v842 = vadd.f32 0.0, %v841
    %843 = vdwg.mxu0
    %v844 = vadd.f32 %v820, %v842
    %v845 = vtanh.pop %v844
    %v846 = vsel %vm162, %v770, %v773
    %v848 = vsel %vm244, %v845, 0
    %850 = vmatpush.msra.mxu0 0.0
    %851 = vmatpush.msra.mxu0 0.0
    %852 = vmatpush.msra.mxu0 0.0
    %853 = vmatpush.msra.mxu0 0.0
    %854 = vmatpush.msra.mxu0 0.0
    %855 = vmatpush.msra.mxu0 0.0
    %856 = vmatpush.msra.mxu0 0.0
    %857 = vmatpush.msra.mxu0 0.0
    %858 = vmatpush.msra.mxu0 %v791
    %859 = vmatpush.msra.mxu0 %v790
    %860 = vmatpush.msra.mxu0 %v789
    %861 = vmatpush.msra.mxu0 %v788
    %862 = vmatpush.msra.mxu0 %v787
    %863 = vmatpush.msra.mxu0 %v786
    %864 = vmatpush.msra.mxu0 %v785
    %865 = vmatpush.msra.mxu0 %v784
    %866 = vmatmul.f32.gmra.mxu0 %v848
    %v867 = vpop.f32.mrf.mxu0
    %v868 = vadd.f32 0.0, %v867
    %869 = vdwg.mxu0
    %v870 = vadd.f32 %v846, %v868
    %v871 = vtanh.pop %v870
    %v872 = vsel %vm162, %v773, %v770
    %v874 = vsel %vm244, %v871, 0
    %876 = vmatpush.msra.mxu0 0.0
    %877 = vmatpush.msra.mxu0 0.0
    %878 = vmatpush.msra.mxu0 0.0
    %879 = vmatpush.msra.mxu0 0.0
    %880 = vmatpush.msra.mxu0 0.0
    %881 = vmatpush.msra.mxu0 0.0
    %882 = vmatpush.msra.mxu0 0.0
    %883 = vmatpush.msra.mxu0 0.0
    %884 = vmatpush.msra.mxu0 %v791
    %885 = vmatpush.msra.mxu0 %v790
    %886 = vmatpush.msra.mxu0 %v789
    %887 = vmatpush.msra.mxu0 %v788
    %888 = vmatpush.msra.mxu0 %v787
    %889 = vmatpush.msra.mxu0 %v786
    %890 = vmatpush.msra.mxu0 %v785
    %891 = vmatpush.msra.mxu0 %v784
    %892 = vmatmul.f32.gmra.mxu0 %v874
    %v893 = vpop.f32.mrf.mxu0
    %v894 = vadd.f32 0.0, %v893
    %895 = vdwg.mxu0
    %v896 = vadd.f32 %v872, %v894
    %v897 = vtanh.pop %v896
    %v898 = vsel %vm162, %v776, %v767
    %v900 = vsel %vm244, %v897, 0
    %902 = vmatpush.msra.mxu0 0.0
    %903 = vmatpush.msra.mxu0 0.0
    %904 = vmatpush.msra.mxu0 0.0
    %905 = vmatpush.msra.mxu0 0.0
    %906 = vmatpush.msra.mxu0 0.0
    %907 = vmatpush.msra.mxu0 0.0
    %908 = vmatpush.msra.mxu0 0.0
    %909 = vmatpush.msra.mxu0 0.0
    %910 = vmatpush.msra.mxu0 %v791
    %911 = vmatpush.msra.mxu0 %v790
    %912 = vmatpush.msra.mxu0 %v789
    %913 = vmatpush.msra.mxu0 %v788
    %914 = vmatpush.msra.mxu0 %v787
    %915 = vmatpush.msra.mxu0 %v786
    %916 = vmatpush.msra.mxu0 %v785
    %917 = vmatpush.msra.mxu0 %v784
    %918 = vmatmul.f32.gmra.mxu0 %v900
    %v919 = vpop.f32.mrf.mxu0
    %v920 = vadd.f32 0.0, %v919
    %921 = vdwg.mxu0
    %v922 = vadd.f32 %v898, %v920
    %v923 = vtanh.pop %v922
    %v924 = vsel %vm162, %v779, %v764
    %v926 = vsel %vm244, %v923, 0
    %928 = vmatpush.msra.mxu0 0.0
    %929 = vmatpush.msra.mxu0 0.0
    %930 = vmatpush.msra.mxu0 0.0
    %931 = vmatpush.msra.mxu0 0.0
    %932 = vmatpush.msra.mxu0 0.0
    %933 = vmatpush.msra.mxu0 0.0
    %934 = vmatpush.msra.mxu0 0.0
    %935 = vmatpush.msra.mxu0 0.0
    %936 = vmatpush.msra.mxu0 %v791
    %937 = vmatpush.msra.mxu0 %v790
    %938 = vmatpush.msra.mxu0 %v789
    %939 = vmatpush.msra.mxu0 %v788
    %940 = vmatpush.msra.mxu0 %v787
    %941 = vmatpush.msra.mxu0 %v786
    %942 = vmatpush.msra.mxu0 %v785
    %943 = vmatpush.msra.mxu0 %v784
    %944 = vmatmul.f32.gmra.mxu0 %v926
    %v945 = vpop.f32.mrf.mxu0
    %v946 = vadd.f32 0.0, %v945
    %947 = vdwg.mxu0
    %v948 = vadd.f32 %v924, %v946
    %v949 = vtanh.pop %v948
    %v950 = vsel %vm162, %v782, %v761
    %v952 = vsel %vm244, %v949, 0
    %954 = vmatpush.msra.mxu0 0.0
    %955 = vmatpush.msra.mxu0 0.0
    %956 = vmatpush.msra.mxu0 0.0
    %957 = vmatpush.msra.mxu0 0.0
    %958 = vmatpush.msra.mxu0 0.0
    %959 = vmatpush.msra.mxu0 0.0
    %960 = vmatpush.msra.mxu0 0.0
    %961 = vmatpush.msra.mxu0 0.0
    %962 = vmatpush.msra.mxu0 %v791
    %963 = vmatpush.msra.mxu0 %v790
    %964 = vmatpush.msra.mxu0 %v789
    %965 = vmatpush.msra.mxu0 %v788
    %966 = vmatpush.msra.mxu0 %v787
    %967 = vmatpush.msra.mxu0 %v786
    %968 = vmatpush.msra.mxu0 %v785
    %969 = vmatpush.msra.mxu0 %v784
    %970 = vmatmul.f32.gmra.mxu0 %v952
    %v971 = vpop.f32.mrf.mxu0
    %v972 = vadd.f32 0.0, %v971
    %973 = vdwg.mxu0
    %v974 = vadd.f32 %v950, %v972
    %v975 = vtanh.pop %v974
    %v976 = vld [vmem:[#allocation2 + $0x150] sm:$0xff]
    %v977 = vld [vmem:[#allocation2 + $0x158] sm:$0xff]
    %v978 = vld [vmem:[#allocation2 + $0x160] sm:$0xff]
    %v979 = vld [vmem:[#allocation2 + $0x168] sm:$0xff]
    %v980 = vld [vmem:[#allocation2 + $0x170] sm:$0xff]
    %v981 = vld [vmem:[#allocation2 + $0x178] sm:$0xff]
    %v982 = vld [vmem:[#allocation2 + $0x180] sm:$0xff]
    %v983 = vld [vmem:[#allocation2 + $0x188] sm:$0xff]
    %v984 = vld [vmem:[#allocation2 + $0x193] sm:$0x1]
    %v985 = vperm.slane %v984, 0
    %v987 = vsel %vm244, %v975, 0
    %989 = vmatpush.msra.mxu0 0.0
    %990 = vmatpush.msra.mxu0 0.0
    %991 = vmatpush.msra.mxu0 0.0
    %992 = vmatpush.msra.mxu0 0.0
    %993 = vmatpush.msra.mxu0 0.0
    %994 = vmatpush.msra.mxu0 0.0
    %995 = vmatpush.msra.mxu0 0.0
    %996 = vmatpush.msra.mxu0 0.0
    %997 = vmatpush.msra.mxu0 %v983
    %998 = vmatpush.msra.mxu0 %v982
    %999 = vmatpush.msra.mxu0 %v981
    %1000 = vmatpush.msra.mxu0 %v980
    %1001 = vmatpush.msra.mxu0 %v979
    %1002 = vmatpush.msra.mxu0 %v978
    %1003 = vmatpush.msra.mxu0 %v977
    %1004 = vmatpush.msra.mxu0 %v976
    %1005 = vmatmul.f32.gmra.mxu0 %v987
    %v1006 = vpop.f32.mrf.mxu0
    %v1007 = vadd.f32 %v985, %v1006
    %1008 = vdwg.mxu0
    %vm1009 = vcmask 58368
    %1010 = vst.msk [vmem:[#allocation5] sm:$0x3] %vm1009, %v1007
    // Predicated region
    $region18: #{_textrnn_fused.1} parent=1 // pred_check
      _
    $region19: #{_textrnn_fused.1} parent=1 // pred_check_branch
      %1012 = sbr.rel (0) target = $region21
    $region20: #{_textrnn_fused.1} parent=1 // pred_region
      %1014 = vsyncadd [#allocation4], 0
      %s1016 = sshll.u32 [#allocation5], 4
      %s1017 = int_to_ptr.vmem [resolvable:$true] %s1016
      %s1018 = sshll.u32 %s3, 4
      %s1019 = int_to_ptr.hbm [resolvable:$true] %s1018
      %1021 = dma.vmem_to_hbm [thread:$0]  %s1017, 32, %s1019, [#allocation4]
    $region21: #{_textrnn_fused.1} parent=1 // pred_fallthru
      _
    // Predicated region
    $region22: #{_textrnn_fused.1} parent=1 // pred_check
      _
    $region23: #{_textrnn_fused.1} parent=1 // pred_check_branch
      %1023 = sbr.rel (0) target = $region25
    $region24: #{_textrnn_fused.1} parent=1 // pred_region
      %1025 = dma.done [#allocation4], 32
    $region25: #{_textrnn_fused.1} parent=1 // pred_fallthru
      _
    %1026 = vsyncpa [#allocation3], 1
    %1027 = vsyncpa [#allocation4], 1

</llo_original>
